<compile_context>
chip_gen: v7x
topology: tpu7x:2x2x1
jax: 0.10.0
libtpu: 0.0.40
codegen_flags: <defaults>
</compile_context>

<pallas_src>
import functools

import jax
import jax.numpy as jnp
from jax.experimental import pallas as pl
from jax.experimental.pallas import tpu as pltpu

EPS = 1e-5
_FIN, _D1, _D2 = 3, 20, 10            # in / layer-1 / layer-2 widths (fixed by module)


def _align8(n):
    return ((n + 7) // 8) * 8


# 8-aligned row offsets of each layer's parameters inside the packed slabs.
_OFF1 = 0
_OFF2 = _align8(_D1)                   # 24
_OFF3 = _OFF2 + _align8(_D2)           # 40


def _relu_ln(y, aux):
    """bias-add -> ReLU -> LayerNorm over the feature (sublane) axis.

    y:   (fout, tb) f32 pre-bias activations (features on sublanes, batch on lanes).
    aux: (fout, 3)  columns = [bias, gamma, beta].
    """
    b = aux[:, 0:1]
    g = aux[:, 1:2]
    beta = aux[:, 2:3]
    y = jnp.maximum(y + b, 0.0)
    mean = jnp.mean(y, axis=0, keepdims=True)
    var = jnp.mean((y - mean) ** 2, axis=0, keepdims=True)   # biased, like torch LN
    return (y - mean) * jax.lax.rsqrt(var + EPS) * g + beta


def ehr_kernel(h_dim, x_ref, wp_ref, ap_ref, o_ref):
    x = x_ref[...].astype(jnp.float32)                       # (3, tb), batch on lanes

    # ---- layer 1: K=3 -> unrolled VPU FMAs (MXU would be >97% padding) ----
    w1 = wp_ref[_OFF1:_OFF1 + _D1, 0:_FIN]                   # (20, 3)
    y1 = (w1[:, 0:1] * x[0:1, :]
          + w1[:, 1:2] * x[1:2, :]
          + w1[:, 2:3] * x[2:3, :])                          # (20, tb)
    h = _relu_ln(y1, ap_ref[_OFF1:_OFF1 + _D1, :])

    # ---- layer 2: (10, 20) @ (20, tb) on the MXU ----
    w2 = wp_ref[_OFF2:_OFF2 + _D2, 0:_D1]                    # (10, 20)
    h = _relu_ln(jnp.dot(w2, h, preferred_element_type=jnp.float32),
                 ap_ref[_OFF2:_OFF2 + _D2, :])

    # nn.Dropout(p=0.01): identity at inference time (module.eval()).
    # TODO(synk): training-mode dropout (pltpu.prng_* mask + 1/(1-p) scale) not implemented.

    # ---- layer 3: (h_dim, 10) @ (10, tb) on the MXU ----
    w3 = wp_ref[_OFF3:_OFF3 + h_dim, 0:_D2]                  # (h_dim, 10)
    h = _relu_ln(jnp.dot(w3, h, preferred_element_type=jnp.float32),
                 ap_ref[_OFF3:_OFF3 + h_dim, :])

    o_ref[...] = h.astype(o_ref.dtype)                       # (h_dim, tb), lane-dense store


def _pack_params(p):
    """Pack per-layer (w, b, gamma, beta) into two 8-row-aligned slabs."""
    h_dim = p["w3"].shape[0]
    rows = _OFF3 + _align8(h_dim)
    wp = jnp.zeros((rows, _D1), jnp.float32)                 # widest weight has 20 cols
    ap = jnp.zeros((rows, 3), jnp.float32)
    for off, idx in ((_OFF1, 1), (_OFF2, 2), (_OFF3, 3)):
        w = p[f"w{idx}"].astype(jnp.float32)
        fout, fin = w.shape
        wp = wp.at[off:off + fout, 0:fin].set(w)
        ap = ap.at[off:off + fout, 0].set(p[f"b{idx}"].astype(jnp.float32))
        ap = ap.at[off:off + fout, 1].set(p[f"g{idx}"].astype(jnp.float32))
        ap = ap.at[off:off + fout, 2].set(p[f"beta{idx}"].astype(jnp.float32))
    return wp, ap


def ehr_forward(x, params, *, tb=4096):
    """x: (B, 3) float32.  params: dict w1..w3, b1..b3, g1..g3, beta1..beta3.

    Returns (B, h_dim), matching EHR(h_dim).forward(x) at inference.
    """
    B, fin = x.shape
    assert fin == _FIN, f"expected {_FIN} input features, got {fin}"
    h_dim = params["w3"].shape[0]

    wp, ap = _pack_params(params)

    # Pad batch to a multiple of 128 (lane width) and pick a tile that divides
    # the padded batch -> no B % tb restriction for callers.
    B_pad = ((B + 127) // 128) * 128
    tb = max(128, min(int(tb), B_pad))
    tb = (tb // 128) * 128
    while B_pad % tb:
        tb -= 128

    # Transposed, zero-padded input: (3, B_pad); batch on the lane axis.
    xt = jnp.pad(x.T.astype(jnp.float32), ((0, 0), (0, B_pad - B)))

    flops = 2 * B_pad * (_FIN * _D1 + _D1 * _D2 + _D2 * h_dim) \
        + 10 * B_pad * (_D1 + _D2 + h_dim)
    bytes_accessed = 4 * (B_pad * (_FIN + h_dim) + int(wp.size) + int(ap.size))

    fn = pl.pallas_call(
        functools.partial(ehr_kernel, h_dim),
        out_shape=jax.ShapeDtypeStruct((h_dim, B_pad), jnp.float32),
        grid_spec=pltpu.PrefetchScalarGridSpec(
            num_scalar_prefetch=0,
            grid=(B_pad // tb,),
            in_specs=[
                pl.BlockSpec((_FIN, tb), lambda i: (0, i)),       # streamed input
                pl.BlockSpec(wp.shape, lambda i: (0, 0)),         # params: fetched once
                pl.BlockSpec(ap.shape, lambda i: (0, 0)),
            ],
            out_specs=pl.BlockSpec((h_dim, tb), lambda i: (0, i)),
        ),
        compiler_params=pltpu.CompilerParams(
            dimension_semantics=("parallel",)),
        cost_estimate=pl.CostEstimate(
            flops=int(flops),
            transcendentals=int(3 * B_pad),
            bytes_accessed=int(bytes_accessed)),
    )
    out_t = fn(xt, wp, ap)                 # (h_dim, B_pad)
    return out_t[:, :B].T                  # back to the PyTorch (B, h_dim) layout


def init_params(key, h_dim):
    """PyTorch-default-style init (uniform +/- 1/sqrt(fan_in); LN gamma=1, beta=0)."""
    dims = [(_FIN, _D1), (_D1, _D2), (_D2, h_dim)]
    params = {}
    for idx, (fin, fout) in enumerate(dims, start=1):
        key, kw, kb = jax.random.split(key, 3)
        bound = 1.0 / float(jnp.sqrt(jnp.float32(fin)))
        params[f"w{idx}"] = jax.random.uniform(kw, (fout, fin), jnp.float32, -bound, bound)
        params[f"b{idx}"] = jax.random.uniform(kb, (fout,), jnp.float32, -bound, bound)
        params[f"g{idx}"] = jnp.ones((fout,), jnp.float32)
        params[f"beta{idx}"] = jnp.zeros((fout,), jnp.float32)
    return params


def _reference(x, p):
    """Plain-JAX reference of the same forward (row-major layout)."""
    h = x.astype(jnp.float32)
    for i in (1, 2, 3):
        y = h @ p[f"w{i}"].T + p[f"b{i}"]
        y = jnp.maximum(y, 0.0)
        mean = jnp.mean(y, axis=-1, keepdims=True)
        var = jnp.mean((y - mean) ** 2, axis=-1, keepdims=True)
        h = (y - mean) / jnp.sqrt(var + EPS) * p[f"g{i}"] + p[f"beta{i}"]
    return h


if __name__ == "__main__":
    key = jax.random.PRNGKey(0)
    k_p, k_x1, k_x2 = jax.random.split(key, 3)

    H_DIM = 32
    params = init_params(k_p, H_DIM)
    fwd = jax.jit(functools.partial(ehr_forward, tb=4096))

    # Small ragged batch (B not a multiple of 128).
    B1 = 16
    x1 = jax.random.normal(k_x1, (B1, _FIN), jnp.float32)
    out1 = jax.block_until_ready(fwd(x1, params))
    ref1 = _reference(x1, params)
    assert out1.shape == (B1, H_DIM)
    assert jnp.allclose(out1, ref1, atol=1e-4, rtol=1e-4), "mismatch vs reference (B=16)"

    # Larger ragged batch exercising the zero-padding path.
    B2 = 300
    x2 = jax.random.normal(k_x2, (B2, _FIN), jnp.float32)
    out2 = jax.block_until_ready(fwd(x2, params))
    ref2 = _reference(x2, params)
    assert out2.shape == (B2, H_DIM)
    assert jnp.allclose(out2, ref2, atol=1e-4, rtol=1e-4), "mismatch vs reference (B=300)"

    print("KERNEL_OK")
</pallas_src>

<mosaic_0001>
module attributes {stable_mosaic.version = 11 : i64} {
  func.func @ehr_kernel(%arg0: i32, %arg1: memref<3x128xf32, #tpu.memory_space<vmem>>, %arg2: memref<72x20xf32, #tpu.memory_space<vmem>>, %arg3: memref<72x3xf32, #tpu.memory_space<vmem>>, %arg4: memref<32x128xf32, #tpu.memory_space<vmem>>) attributes {dimension_semantics = [#tpu.dimension_semantics<parallel>], iteration_bounds = array<i64: 1>, scalar_prefetch = 0 : i64, scratch_operands = 0 : i64, tpu.core_type = #tpu.core_type<tc>, window_params = [{transform_indices = @transform_0, window_bounds = array<i64: 3, 128>}, {pipeline_mode = #tpu.pipeline_mode<synchronous>, transform_indices = @transform_1, window_bounds = array<i64: 72, 20>}, {pipeline_mode = #tpu.pipeline_mode<synchronous>, transform_indices = @transform_2, window_bounds = array<i64: 72, 3>}, {transform_indices = @transform_3, window_bounds = array<i64: 32, 128>}]} {
    %c0 = arith.constant 0 : index
    %c0_0 = arith.constant 0 : index
    %0 = vector.load %arg1[%c0, %c0_0] : memref<3x128xf32, #tpu.memory_space<vmem>>, vector<3x128xf32>
    %c0_1 = arith.constant 0 : index
    %c0_2 = arith.constant 0 : index
    %1 = vector.load %arg2[%c0_1, %c0_2] : memref<72x20xf32, #tpu.memory_space<vmem>>, vector<20x3xf32>
    %2 = vector.extract_strided_slice %1 {offsets = [0, 0], sizes = [20, 1], strides = [1, 1]} : vector<20x3xf32> to vector<20x1xf32>
    %3 = vector.extract_strided_slice %0 {offsets = [0, 0], sizes = [1, 128], strides = [1, 1]} : vector<3x128xf32> to vector<1x128xf32>
    %4 = vector.broadcast %2 : vector<20x1xf32> to vector<20x128xf32>
    %5 = vector.broadcast %3 : vector<1x128xf32> to vector<20x128xf32>
    %6 = arith.mulf %4, %5 : vector<20x128xf32>
    %7 = vector.extract_strided_slice %1 {offsets = [0, 1], sizes = [20, 1], strides = [1, 1]} : vector<20x3xf32> to vector<20x1xf32>
    %8 = vector.extract_strided_slice %0 {offsets = [1, 0], sizes = [1, 128], strides = [1, 1]} : vector<3x128xf32> to vector<1x128xf32>
    %9 = vector.broadcast %7 : vector<20x1xf32> to vector<20x128xf32>
    %10 = vector.broadcast %8 : vector<1x128xf32> to vector<20x128xf32>
    %11 = arith.mulf %9, %10 : vector<20x128xf32>
    %12 = arith.addf %6, %11 : vector<20x128xf32>
    %13 = vector.extract_strided_slice %1 {offsets = [0, 2], sizes = [20, 1], strides = [1, 1]} : vector<20x3xf32> to vector<20x1xf32>
    %14 = vector.extract_strided_slice %0 {offsets = [2, 0], sizes = [1, 128], strides = [1, 1]} : vector<3x128xf32> to vector<1x128xf32>
    %15 = vector.broadcast %13 : vector<20x1xf32> to vector<20x128xf32>
    %16 = vector.broadcast %14 : vector<1x128xf32> to vector<20x128xf32>
    %17 = arith.mulf %15, %16 : vector<20x128xf32>
    %18 = arith.addf %12, %17 : vector<20x128xf32>
    %c0_3 = arith.constant 0 : index
    %c0_4 = arith.constant 0 : index
    %19 = vector.load %arg3[%c0_3, %c0_4] : memref<72x3xf32, #tpu.memory_space<vmem>>, vector<20x3xf32>
    %20 = vector.extract_strided_slice %19 {offsets = [0, 0], sizes = [20, 1], strides = [1, 1]} : vector<20x3xf32> to vector<20x1xf32>
    %21 = vector.extract_strided_slice %19 {offsets = [0, 1], sizes = [20, 1], strides = [1, 1]} : vector<20x3xf32> to vector<20x1xf32>
    %22 = vector.extract_strided_slice %19 {offsets = [0, 2], sizes = [20, 1], strides = [1, 1]} : vector<20x3xf32> to vector<20x1xf32>
    %23 = vector.broadcast %20 : vector<20x1xf32> to vector<20x128xf32>
    %24 = arith.addf %18, %23 : vector<20x128xf32>
    %cst = arith.constant 0.000000e+00 : f32
    %25 = vector.broadcast %cst : f32 to vector<20x128xf32>
    %26 = arith.maximumf %24, %25 : vector<20x128xf32>
    %cst_5 = arith.constant dense<0.000000e+00> : vector<128xf32>
    %27 = vector.multi_reduction <add>, %26, %cst_5 [0] : vector<20x128xf32> to vector<128xf32>
    %28 = vector.shape_cast %27 : vector<128xf32> to vector<1x128xf32>
    %cst_6 = arith.constant 2.000000e+01 : f32
    %29 = vector.broadcast %cst_6 : f32 to vector<1x128xf32>
    %30 = arith.divf %28, %29 : vector<1x128xf32>
    %31 = vector.broadcast %30 : vector<1x128xf32> to vector<20x128xf32>
    %32 = arith.subf %26, %31 : vector<20x128xf32>
    %33 = arith.mulf %32, %32 : vector<20x128xf32>
    %cst_7 = arith.constant dense<0.000000e+00> : vector<128xf32>
    %34 = vector.multi_reduction <add>, %33, %cst_7 [0] : vector<20x128xf32> to vector<128xf32>
    %35 = vector.shape_cast %34 : vector<128xf32> to vector<1x128xf32>
    %cst_8 = arith.constant 2.000000e+01 : f32
    %36 = vector.broadcast %cst_8 : f32 to vector<1x128xf32>
    %37 = arith.divf %35, %36 : vector<1x128xf32>
    %38 = vector.broadcast %30 : vector<1x128xf32> to vector<20x128xf32>
    %39 = arith.subf %26, %38 : vector<20x128xf32>
    %cst_9 = arith.constant 9.99999974E-6 : f32
    %40 = vector.broadcast %cst_9 : f32 to vector<1x128xf32>
    %41 = arith.addf %37, %40 : vector<1x128xf32>
    %42 = math.rsqrt %41 : vector<1x128xf32>
    %43 = vector.broadcast %42 : vector<1x128xf32> to vector<20x128xf32>
    %44 = arith.mulf %39, %43 : vector<20x128xf32>
    %45 = vector.broadcast %21 : vector<20x1xf32> to vector<20x128xf32>
    %46 = arith.mulf %44, %45 : vector<20x128xf32>
    %47 = vector.broadcast %22 : vector<20x1xf32> to vector<20x128xf32>
    %48 = arith.addf %46, %47 : vector<20x128xf32>
    %c24 = arith.constant 24 : index
    %c0_10 = arith.constant 0 : index
    %49 = vector.load %arg2[%c24, %c0_10] : memref<72x20xf32, #tpu.memory_space<vmem>>, vector<10x20xf32>
    %cst_11 = arith.constant dense<0.000000e+00> : vector<10x128xf32>
    %50 = tpu.matmul %49, %48, %cst_11 {dimension_numbers = #tpu.dot_dimension_numbers<[1], [0], [0], [1], [0, 0, 1, 1], [], []>} : vector<10x20xf32>, vector<20x128xf32>, vector<10x128xf32> -> vector<10x128xf32>
    %c24_12 = arith.constant 24 : index
    %c0_13 = arith.constant 0 : index
    %51 = vector.load %arg3[%c24_12, %c0_13] : memref<72x3xf32, #tpu.memory_space<vmem>>, vector<10x3xf32>
    %52 = vector.extract_strided_slice %51 {offsets = [0, 0], sizes = [10, 1], strides = [1, 1]} : vector<10x3xf32> to vector<10x1xf32>
    %53 = vector.extract_strided_slice %51 {offsets = [0, 1], sizes = [10, 1], strides = [1, 1]} : vector<10x3xf32> to vector<10x1xf32>
    %54 = vector.extract_strided_slice %51 {offsets = [0, 2], sizes = [10, 1], strides = [1, 1]} : vector<10x3xf32> to vector<10x1xf32>
    %55 = vector.broadcast %52 : vector<10x1xf32> to vector<10x128xf32>
    %56 = arith.addf %50, %55 : vector<10x128xf32>
    %cst_14 = arith.constant 0.000000e+00 : f32
    %57 = vector.broadcast %cst_14 : f32 to vector<10x128xf32>
    %58 = arith.maximumf %56, %57 : vector<10x128xf32>
    %cst_15 = arith.constant dense<0.000000e+00> : vector<128xf32>
    %59 = vector.multi_reduction <add>, %58, %cst_15 [0] : vector<10x128xf32> to vector<128xf32>
    %60 = vector.shape_cast %59 : vector<128xf32> to vector<1x128xf32>
    %cst_16 = arith.constant 1.000000e+01 : f32
    %61 = vector.broadcast %cst_16 : f32 to vector<1x128xf32>
    %62 = arith.divf %60, %61 : vector<1x128xf32>
    %63 = vector.broadcast %62 : vector<1x128xf32> to vector<10x128xf32>
    %64 = arith.subf %58, %63 : vector<10x128xf32>
    %65 = arith.mulf %64, %64 : vector<10x128xf32>
    %cst_17 = arith.constant dense<0.000000e+00> : vector<128xf32>
    %66 = vector.multi_reduction <add>, %65, %cst_17 [0] : vector<10x128xf32> to vector<128xf32>
    %67 = vector.shape_cast %66 : vector<128xf32> to vector<1x128xf32>
    %cst_18 = arith.constant 1.000000e+01 : f32
    %68 = vector.broadcast %cst_18 : f32 to vector<1x128xf32>
    %69 = arith.divf %67, %68 : vector<1x128xf32>
    %70 = vector.broadcast %62 : vector<1x128xf32> to vector<10x128xf32>
    %71 = arith.subf %58, %70 : vector<10x128xf32>
    %cst_19 = arith.constant 9.99999974E-6 : f32
    %72 = vector.broadcast %cst_19 : f32 to vector<1x128xf32>
    %73 = arith.addf %69, %72 : vector<1x128xf32>
    %74 = math.rsqrt %73 : vector<1x128xf32>
    %75 = vector.broadcast %74 : vector<1x128xf32> to vector<10x128xf32>
    %76 = arith.mulf %71, %75 : vector<10x128xf32>
    %77 = vector.broadcast %53 : vector<10x1xf32> to vector<10x128xf32>
    %78 = arith.mulf %76, %77 : vector<10x128xf32>
    %79 = vector.broadcast %54 : vector<10x1xf32> to vector<10x128xf32>
    %80 = arith.addf %78, %79 : vector<10x128xf32>
    %c40 = arith.constant 40 : index
    %c0_20 = arith.constant 0 : index
    %81 = vector.load %arg2[%c40, %c0_20] : memref<72x20xf32, #tpu.memory_space<vmem>>, vector<32x10xf32>
    %cst_21 = arith.constant dense<0.000000e+00> : vector<32x128xf32>
    %82 = tpu.matmul %81, %80, %cst_21 {dimension_numbers = #tpu.dot_dimension_numbers<[1], [0], [0], [1], [0, 0, 1, 1], [], []>} : vector<32x10xf32>, vector<10x128xf32>, vector<32x128xf32> -> vector<32x128xf32>
    %c40_22 = arith.constant 40 : index
    %c0_23 = arith.constant 0 : index
    %83 = vector.load %arg3[%c40_22, %c0_23] : memref<72x3xf32, #tpu.memory_space<vmem>>, vector<32x3xf32>
    %84 = vector.extract_strided_slice %83 {offsets = [0, 0], sizes = [32, 1], strides = [1, 1]} : vector<32x3xf32> to vector<32x1xf32>
    %85 = vector.extract_strided_slice %83 {offsets = [0, 1], sizes = [32, 1], strides = [1, 1]} : vector<32x3xf32> to vector<32x1xf32>
    %86 = vector.extract_strided_slice %83 {offsets = [0, 2], sizes = [32, 1], strides = [1, 1]} : vector<32x3xf32> to vector<32x1xf32>
    %87 = vector.broadcast %84 : vector<32x1xf32> to vector<32x128xf32>
    %88 = arith.addf %82, %87 : vector<32x128xf32>
    %cst_24 = arith.constant 0.000000e+00 : f32
    %89 = vector.broadcast %cst_24 : f32 to vector<32x128xf32>
    %90 = arith.maximumf %88, %89 : vector<32x128xf32>
    %cst_25 = arith.constant dense<0.000000e+00> : vector<128xf32>
    %91 = vector.multi_reduction <add>, %90, %cst_25 [0] : vector<32x128xf32> to vector<128xf32>
    %92 = vector.shape_cast %91 : vector<128xf32> to vector<1x128xf32>
    %cst_26 = arith.constant 3.200000e+01 : f32
    %93 = vector.broadcast %cst_26 : f32 to vector<1x128xf32>
    %94 = arith.divf %92, %93 : vector<1x128xf32>
    %95 = vector.broadcast %94 : vector<1x128xf32> to vector<32x128xf32>
    %96 = arith.subf %90, %95 : vector<32x128xf32>
    %97 = arith.mulf %96, %96 : vector<32x128xf32>
    %cst_27 = arith.constant dense<0.000000e+00> : vector<128xf32>
    %98 = vector.multi_reduction <add>, %97, %cst_27 [0] : vector<32x128xf32> to vector<128xf32>
    %99 = vector.shape_cast %98 : vector<128xf32> to vector<1x128xf32>
    %cst_28 = arith.constant 3.200000e+01 : f32
    %100 = vector.broadcast %cst_28 : f32 to vector<1x128xf32>
    %101 = arith.divf %99, %100 : vector<1x128xf32>
    %102 = vector.broadcast %94 : vector<1x128xf32> to vector<32x128xf32>
    %103 = arith.subf %90, %102 : vector<32x128xf32>
    %cst_29 = arith.constant 9.99999974E-6 : f32
    %104 = vector.broadcast %cst_29 : f32 to vector<1x128xf32>
    %105 = arith.addf %101, %104 : vector<1x128xf32>
    %106 = math.rsqrt %105 : vector<1x128xf32>
    %107 = vector.broadcast %106 : vector<1x128xf32> to vector<32x128xf32>
    %108 = arith.mulf %103, %107 : vector<32x128xf32>
    %109 = vector.broadcast %85 : vector<32x1xf32> to vector<32x128xf32>
    %110 = arith.mulf %108, %109 : vector<32x128xf32>
    %111 = vector.broadcast %86 : vector<32x1xf32> to vector<32x128xf32>
    %112 = arith.addf %110, %111 : vector<32x128xf32>
    %c0_30 = arith.constant 0 : index
    %c0_31 = arith.constant 0 : index
    %113 = vector.load %arg4[%c0_30, %c0_31] : memref<32x128xf32, #tpu.memory_space<vmem>>, vector<32x128xf32>
    tpu.vector_store %arg4[%c0_30, %c0_31], %112 {strides = array<i32>} : memref<32x128xf32, #tpu.memory_space<vmem>>, vector<32x128xf32>,
    return
  }
  func.func @transform_0(%arg0: i32) -> (i32, i32) {
    %c0_i32 = arith.constant 0 : i32
    %c0_i32_0 = arith.constant 0 : i32
    return %c0_i32, %arg0 : i32, i32
  }
  func.func @transform_1(%arg0: i32) -> (i32, i32) {
    %c0_i32 = arith.constant 0 : i32
    %c0_i32_0 = arith.constant 0 : i32
    %c0_i32_1 = arith.constant 0 : i32
    return %c0_i32, %c0_i32_0 : i32, i32
  }
  func.func @transform_2(%arg0: i32) -> (i32, i32) {
    %c0_i32 = arith.constant 0 : i32
    %c0_i32_0 = arith.constant 0 : i32
    %c0_i32_1 = arith.constant 0 : i32
    return %c0_i32, %c0_i32_0 : i32, i32
  }
  func.func @transform_3(%arg0: i32) -> (i32, i32) {
    %c0_i32 = arith.constant 0 : i32
    %c0_i32_0 = arith.constant 0 : i32
    return %c0_i32, %arg0 : i32, i32
  }
}

</mosaic_0001>

<llo_original>
// kernel: ehr_forward.1
$region0: #{ehr_forward.1}
  #allocation0 [shape = 'u32[]', space=smem, size = 0x4, offset = 0x4, fixed_abs, tag = 'smem constant byte address 0x4 - core index']
  #allocation1 [shape = 'u32[144,128]{1,0:T(1,128)}', space=vmem, size = 0x12000, scoped, tag = 'internal scratch']
  %s0 = inlined_call_operand.vmem [shape: f32[3,128], index: 0, kind: input, shape index: {}]
  %s1 = inlined_call_operand.vmem [shape: f32[72,20], index: 1, kind: input, shape index: {}]
  %s2 = inlined_call_operand.vmem [shape: f32[72,3], index: 2, kind: input, shape index: {}]
  %s3 = inlined_call_operand.vmem [shape: f32[32,128], index: 3, kind: output, shape index: {}]
  %s4 = sld [smem:[#allocation0]]
  $region22: #{ehr_forward.1} parent=0
    _
  %s6 = ssub.s32 1, %s4
  %s7 = scalar_select 0, %s6, %s4
  // Predicated region
  $region2: #{ehr_forward.1} parent=0 // pred_check
    _
  $region3: #{ehr_forward.1} parent=0 // pred_check_branch
    %9 = sbr.rel (0) target = $region5
  $region4: #{ehr_forward.1} parent=0 // pred_region
    _
  $region5: #{ehr_forward.1} parent=0 // pred_fallthru
    _
  // Predicated region
  $region6: #{ehr_forward.1} parent=0 // pred_check
    _
  $region7: #{ehr_forward.1} parent=0 // pred_check_branch
    %11 = sbr.rel (0) target = $region9
  $region8: #{ehr_forward.1} parent=0 // pred_region
    _
  $region9: #{ehr_forward.1} parent=0 // pred_fallthru
    _
  // Predicated region
  $region10: #{ehr_forward.1} parent=0 // pred_check
    _
  $region11: #{ehr_forward.1} parent=0 // pred_check_branch
    %13 = sbr.rel (0) target = $region13
  $region12: #{ehr_forward.1} parent=0 // pred_region
    _
  $region13: #{ehr_forward.1} parent=0 // pred_fallthru
    _
  %v14 = vld [vmem:[%s0] sm:$0x7]
  %v15 = vld [vmem:[%s1] sm:$0xff]
  %v16 = vld [vmem:[%s1 + $0x8] sm:$0xff]
  %v17 = vld [vmem:[%s1 + $0x10] sm:$0xf]
  %19 = vset.pattern.permute.xlu0 0
  %20 = vperm.xlu0 %19, %v15
  %v21 = vpop.permute.xlu0 %20
  %24 = vset.pattern.permute.xlu0 0
  %25 = vperm.xlu0 %24, %v16
  %v26 = vpop.permute.xlu0 %25
  %29 = vset.pattern.permute.xlu0 0
  %30 = vperm.xlu0 %29, %v17
  %v31 = vpop.permute.xlu0 %30
  %v33 = vlaneseq
  %v34 = vshrl.u32 %v33, 7
  %v35 = vsub.s32 0, %v34
  %v36 = vrot.slane %v14, %v35
  %v37 = vmul.f32 %v21, %v36
  %v38 = vmul.f32 %v26, %v36
  %v39 = vmul.f32 %v31, %v36
  %40 = vset.pattern.permute.xlu0 1
  %41 = vperm.xlu0 %40, %v15
  %v42 = vpop.permute.xlu0 %41
  %44 = vset.pattern.permute.xlu0 1
  %45 = vperm.xlu0 %44, %v16
  %v46 = vpop.permute.xlu0 %45
  %48 = vset.pattern.permute.xlu0 1
  %49 = vperm.xlu0 %48, %v17
  %v50 = vpop.permute.xlu0 %49
  %v52 = vlaneseq
  %v53 = vshrl.u32 %v52, 7
  %v54 = vsub.s32 1, %v53
  %v55 = vrot.slane %v14, %v54
  %v56 = vmul.f32 %v42, %v55
  %v57 = vmul.f32 %v46, %v55
  %v58 = vmul.f32 %v50, %v55
  %v59 = vadd.f32 %v37, %v56
  %v60 = vadd.f32 %v38, %v57
  %v61 = vadd.f32 %v39, %v58
  %62 = vset.pattern.permute.xlu0 2
  %63 = vperm.xlu0 %62, %v15
  %v64 = vpop.permute.xlu0 %63
  %66 = vset.pattern.permute.xlu0 2
  %67 = vperm.xlu0 %66, %v16
  %v68 = vpop.permute.xlu0 %67
  %70 = vset.pattern.permute.xlu0 2
  %71 = vperm.xlu0 %70, %v17
  %v72 = vpop.permute.xlu0 %71
  %v74 = vlaneseq
  %v75 = vshrl.u32 %v74, 7
  %v76 = vsub.s32 2, %v75
  %v77 = vrot.slane %v14, %v76
  %v78 = vmul.f32 %v64, %v77
  %v79 = vmul.f32 %v68, %v77
  %v80 = vmul.f32 %v72, %v77
  %v81 = vadd.f32 %v59, %v78
  %v82 = vadd.f32 %v60, %v79
  %v83 = vadd.f32 %v61, %v80
  %v84 = vld [vmem:[%s2] sm:$0xff]
  %v85 = vld [vmem:[%s2 + $0x8] sm:$0xff]
  %v86 = vld [vmem:[%s2 + $0x10] sm:$0xf]
  %88 = vset.pattern.permute.xlu0 0
  %89 = vperm.xlu0 %88, %v84
  %v90 = vpop.permute.xlu0 %89
  %93 = vset.pattern.permute.xlu0 0
  %94 = vperm.xlu0 %93, %v85
  %v95 = vpop.permute.xlu0 %94
  %98 = vset.pattern.permute.xlu0 0
  %99 = vperm.xlu0 %98, %v86
  %v100 = vpop.permute.xlu0 %99
  %v102 = vadd.f32 %v81, %v90
  %v103 = vadd.f32 %v82, %v95
  %v104 = vadd.f32 %v83, %v100
  %v105 = vmax.f32 %v102, 0.0
  %v106 = vmax.f32 %v103, 0.0
  %v107 = vmax.f32 %v104, 0.0
  %v108 = vadd.f32 %v105, %v106
  %vm109 = vcmask 1043456
  %v110 = vsel %vm109, %v107, 0.0
  %v111 = vadd.f32 %v108, %v110
  %v112 = vrot.slane %v111, 4
  %v113 = vadd.f32 %v111, %v112
  %v114 = vrot.slane %v113, 2
  %v115 = vadd.f32 %v113, %v114
  %v116 = vrot.slane %v115, 1
  %v117 = vadd.f32 %v115, %v116
  %v118 = vrcp.pop 20.0
  %v119 = vmul.f32 %v117, %v118
  %v120 = vsub.f32 %v105, %v119
  %v121 = vsub.f32 %v106, %v119
  %v122 = vsub.f32 %v107, %v119
  %v123 = vmul.f32 %v120, %v120
  %v124 = vmul.f32 %v121, %v121
  %v125 = vmul.f32 %v122, %v122
  %v126 = vadd.f32 %v123, %v124
  %v127 = vsel %vm109, %v125, 0.0
  %v128 = vadd.f32 %v126, %v127
  %v129 = vrot.slane %v128, 4
  %v130 = vadd.f32 %v128, %v129
  %v131 = vrot.slane %v130, 2
  %v132 = vadd.f32 %v130, %v131
  %v133 = vrot.slane %v132, 1
  %v134 = vadd.f32 %v132, %v133
  %v135 = vmul.f32 %v134, %v118
  %v136 = vadd.f32 %v135, 1e-05
  %v137 = vrsqrt.pop %v136
  %v138 = vmul.f32 %v120, %v137
  %v139 = vmul.f32 %v121, %v137
  %v140 = vmul.f32 %v122, %v137
  %141 = vset.pattern.permute.xlu0 1
  %142 = vperm.xlu0 %141, %v84
  %v143 = vpop.permute.xlu0 %142
  %145 = vset.pattern.permute.xlu0 1
  %146 = vperm.xlu0 %145, %v85
  %v147 = vpop.permute.xlu0 %146
  %149 = vset.pattern.permute.xlu0 1
  %150 = vperm.xlu0 %149, %v86
  %v151 = vpop.permute.xlu0 %150
  %v153 = vmul.f32 %v138, %v143
  %v154 = vmul.f32 %v139, %v147
  %v155 = vmul.f32 %v140, %v151
  %156 = vset.pattern.permute.xlu0 2
  %157 = vperm.xlu0 %156, %v84
  %v158 = vpop.permute.xlu0 %157
  %160 = vset.pattern.permute.xlu0 2
  %161 = vperm.xlu0 %160, %v85
  %v162 = vpop.permute.xlu0 %161
  %164 = vset.pattern.permute.xlu0 2
  %165 = vperm.xlu0 %164, %v86
  %v166 = vpop.permute.xlu0 %165
  %v168 = vadd.f32 %v153, %v158
  %v169 = vadd.f32 %v154, %v162
  %v170 = vadd.f32 %v155, %v166
  %v171 = vld [vmem:[%s1 + $0x18] sm:$0xff]
  %v172 = vld [vmem:[%s1 + $0x20] sm:$0x3]
  %v173 = vld [vmem:[%s2 + $0x18] sm:$0xff]
  %v174 = vld [vmem:[%s2 + $0x20] sm:$0x3]
  %176 = vset.pattern.permute.xlu0 0
  %177 = vperm.xlu0 %176, %v173
  %v178 = vpop.permute.xlu0 %177
  %181 = vset.pattern.permute.xlu0 0
  %182 = vperm.xlu0 %181, %v174
  %v183 = vpop.permute.xlu0 %182
  %vm185 = vcmask 162816
  %v187 = vsel %vm185, %v171, 0
  %v190 = vsel %vm185, %v172, 0
  %v193 = vsel %vm109, %v170, 0
  %195 = vmatprep.subr.mxu0 0.0
  %196 = vmatpush1.msra.mxu0 %v168
  %197 = vmatprep.subr.mxu0 0.0
  %198 = vmatpush1.msra.mxu0 %v169
  %199 = vmatprep.subr.mxu0 0.0
  %200 = vmatpush1.msra.mxu0 %v193
  %201 = vmatprep.subr.mxu0 0.0
  %202 = vmatpush1.msra.mxu0 0.0
  %203 = vmatprep.subr.mxu0 0.0
  %204 = vmatpush1.msra.mxu0 0.0
  %205 = vmatprep.subr.mxu0 0.0
  %206 = vmatpush1.msra.mxu0 0.0
  %207 = vmatprep.subr.mxu0 0.0
  %208 = vmatpush1.msra.mxu0 0.0
  %209 = vmatprep.subr.mxu0 0.0
  %210 = vmatpush1.msra.mxu0 0.0
  %211 = vmatprep.subr.mxu0 0.0
  %212 = vmatpush1.msra.mxu0 0.0
  %213 = vmatprep.subr.mxu0 0.0
  %214 = vmatpush1.msra.mxu0 0.0
  %215 = vmatprep.subr.mxu0 0.0
  %216 = vmatpush1.msra.mxu0 0.0
  %217 = vmatprep.subr.mxu0 0.0
  %218 = vmatpush1.msra.mxu0 0.0
  %219 = vmatprep.subr.mxu0 0.0
  %220 = vmatpush1.msra.mxu0 0.0
  %221 = vmatprep.subr.mxu0 0.0
  %222 = vmatpush1.msra.mxu0 0.0
  %223 = vmatprep.subr.mxu0 0.0
  %224 = vmatpush1.msra.mxu0 0.0
  %225 = vmatprep.subr.mxu0 0.0
  %226 = vmatpush1.msra.mxu0 0.0
  %227 = vmatprep.subr.mxu0 0.0
  %228 = vmatpush1.msra.mxu0 0.0
  %229 = vmatprep.subr.mxu0 0.0
  %230 = vmatpush1.msra.mxu0 0.0
  %231 = vmatprep.subr.mxu0 0.0
  %232 = vmatpush1.msra.mxu0 0.0
  %233 = vmatprep.subr.mxu0 0.0
  %234 = vmatpush1.msra.mxu0 0.0
  %235 = vmatprep.subr.mxu0 0.0
  %236 = vmatpush1.msra.mxu0 0.0
  %237 = vmatprep.subr.mxu0 0.0
  %238 = vmatpush1.msra.mxu0 0.0
  %239 = vmatprep.subr.mxu0 0.0
  %240 = vmatpush1.msra.mxu0 0.0
  %241 = vmatprep.subr.mxu0 0.0
  %242 = vmatpush1.msra.mxu0 0.0
  %243 = vmatprep.subr.mxu0 0.0
  %244 = vmatpush1.msra.mxu0 0.0
  %245 = vmatprep.subr.mxu0 0.0
  %246 = vmatpush1.msra.mxu0 0.0
  %247 = vmatprep.subr.mxu0 0.0
  %248 = vmatpush1.msra.mxu0 0.0
  %249 = vmatprep.subr.mxu0 0.0
  %250 = vmatpush1.msra.mxu0 0.0
  %251 = vmatprep.subr.mxu0 0.0
  %252 = vmatpush1.msra.mxu0 0.0
  %253 = vmatprep.subr.mxu0 0.0
  %254 = vmatpush1.msra.mxu0 0.0
  %255 = vmatprep.subr.mxu0 0.0
  %256 = vmatpush1.msra.mxu0 0.0
  %257 = vmatprep.subr.mxu0 0.0
  %258 = vmatpush1.msra.mxu0 0.0
  %259 = vmatprep.mubr.f32.mxu0 0.0
  %260 = vmatmul.mubr.f32.gmra.mrb[0].mxu0 %v187
  %v261 = vpop.f32.mrb[0].mxu0
  %v262 = vadd.f32 %v178, %v261
  %v263 = vpop.f32.mrb[0].mxu0
  %264 = vmatprep.mubr.f32.mxu0 0.0
  %265 = vmatmul.mubr.f32.gmra.mrb[0].mxu0 %v190
  %v266 = vpop.f32.mrb[0].mxu0
  %v267 = vadd.f32 %v183, %v266
  %v268 = vpop.f32.mrb[0].mxu0
  %269 = vdwg.mxu0
  %v270 = vmax.f32 %v262, 0.0
  %v271 = vmax.f32 %v267, 0.0
  %vm272 = vcmask 1041408
  %v273 = vsel %vm272, %v271, 0.0
  %v274 = vadd.f32 %v270, %v273
  %v275 = vrot.slane %v274, 4
  %v276 = vadd.f32 %v274, %v275
  %v277 = vrot.slane %v276, 2
  %v278 = vadd.f32 %v276, %v277
  %v279 = vrot.slane %v278, 1
  %v280 = vadd.f32 %v278, %v279
  %v281 = vrcp.pop 10.0
  %v282 = vmul.f32 %v280, %v281
  %v283 = vsub.f32 %v270, %v282
  %v284 = vsub.f32 %v271, %v282
  %v285 = vmul.f32 %v283, %v283
  %v286 = vmul.f32 %v284, %v284
  %v287 = vsel %vm272, %v286, 0.0
  %v288 = vadd.f32 %v285, %v287
  %v289 = vrot.slane %v288, 4
  %v290 = vadd.f32 %v288, %v289
  %v291 = vrot.slane %v290, 2
  %v292 = vadd.f32 %v290, %v291
  %v293 = vrot.slane %v292, 1
  %v294 = vadd.f32 %v292, %v293
  %v295 = vmul.f32 %v294, %v281
  %v296 = vadd.f32 %v295, 1e-05
  %v297 = vrsqrt.pop %v296
  %v298 = vmul.f32 %v283, %v297
  %v299 = vmul.f32 %v284, %v297
  %300 = vset.pattern.permute.xlu0 1
  %301 = vperm.xlu0 %300, %v173
  %v302 = vpop.permute.xlu0 %301
  %304 = vset.pattern.permute.xlu0 1
  %305 = vperm.xlu0 %304, %v174
  %v306 = vpop.permute.xlu0 %305
  %v308 = vmul.f32 %v298, %v302
  %v309 = vmul.f32 %v299, %v306
  %310 = vset.pattern.permute.xlu0 2
  %311 = vperm.xlu0 %310, %v173
  %v312 = vpop.permute.xlu0 %311
  %314 = vset.pattern.permute.xlu0 2
  %315 = vperm.xlu0 %314, %v174
  %v316 = vpop.permute.xlu0 %315
  %v318 = vadd.f32 %v308, %v312
  %v319 = vadd.f32 %v309, %v316
  %v320 = vld [vmem:[%s1 + $0x28] sm:$0xff]
  %v321 = vld [vmem:[%s1 + $0x30] sm:$0xff]
  %v322 = vld [vmem:[%s1 + $0x38] sm:$0xff]
  %v323 = vld [vmem:[%s1 + $0x40] sm:$0xff]
  %v324 = vld [vmem:[%s2 + $0x28] sm:$0xff]
  %v325 = vld [vmem:[%s2 + $0x30] sm:$0xff]
  %v326 = vld [vmem:[%s2 + $0x38] sm:$0xff]
  %v327 = vld [vmem:[%s2 + $0x40] sm:$0xff]
  %329 = vset.pattern.permute.xlu0 0
  %330 = vperm.xlu0 %329, %v324
  %v331 = vpop.permute.xlu0 %330
  %334 = vset.pattern.permute.xlu0 0
  %335 = vperm.xlu0 %334, %v325
  %v336 = vpop.permute.xlu0 %335
  %339 = vset.pattern.permute.xlu0 0
  %340 = vperm.xlu0 %339, %v326
  %v341 = vpop.permute.xlu0 %340
  %344 = vset.pattern.permute.xlu0 0
  %345 = vperm.xlu0 %344, %v327
  %v346 = vpop.permute.xlu0 %345
  %vm348 = vcmask 80896
  %v350 = vsel %vm348, %v320, 0
  %v353 = vsel %vm348, %v321, 0
  %v356 = vsel %vm348, %v322, 0
  %v359 = vsel %vm348, %v323, 0
  %v362 = vsel %vm272, %v319, 0
  %364 = vmatprep.subr.mxu0 0.0
  %365 = vmatpush1.msra.mxu0 %v318
  %366 = vmatprep.subr.mxu0 0.0
  %367 = vmatpush1.msra.mxu0 %v362
  %368 = vmatprep.subr.mxu0 0.0
  %369 = vmatpush1.msra.mxu0 0.0
  %370 = vmatprep.subr.mxu0 0.0
  %371 = vmatpush1.msra.mxu0 0.0
  %372 = vmatprep.subr.mxu0 0.0
  %373 = vmatpush1.msra.mxu0 0.0
  %374 = vmatprep.subr.mxu0 0.0
  %375 = vmatpush1.msra.mxu0 0.0
  %376 = vmatprep.subr.mxu0 0.0
  %377 = vmatpush1.msra.mxu0 0.0
  %378 = vmatprep.subr.mxu0 0.0
  %379 = vmatpush1.msra.mxu0 0.0
  %380 = vmatprep.subr.mxu0 0.0
  %381 = vmatpush1.msra.mxu0 0.0
  %382 = vmatprep.subr.mxu0 0.0
  %383 = vmatpush1.msra.mxu0 0.0
  %384 = vmatprep.subr.mxu0 0.0
  %385 = vmatpush1.msra.mxu0 0.0
  %386 = vmatprep.subr.mxu0 0.0
  %387 = vmatpush1.msra.mxu0 0.0
  %388 = vmatprep.subr.mxu0 0.0
  %389 = vmatpush1.msra.mxu0 0.0
  %390 = vmatprep.subr.mxu0 0.0
  %391 = vmatpush1.msra.mxu0 0.0
  %392 = vmatprep.subr.mxu0 0.0
  %393 = vmatpush1.msra.mxu0 0.0
  %394 = vmatprep.subr.mxu0 0.0
  %395 = vmatpush1.msra.mxu0 0.0
  %396 = vmatprep.subr.mxu0 0.0
  %397 = vmatpush1.msra.mxu0 0.0
  %398 = vmatprep.subr.mxu0 0.0
  %399 = vmatpush1.msra.mxu0 0.0
  %400 = vmatprep.subr.mxu0 0.0
  %401 = vmatpush1.msra.mxu0 0.0
  %402 = vmatprep.subr.mxu0 0.0
  %403 = vmatpush1.msra.mxu0 0.0
  %404 = vmatprep.subr.mxu0 0.0
  %405 = vmatpush1.msra.mxu0 0.0
  %406 = vmatprep.subr.mxu0 0.0
  %407 = vmatpush1.msra.mxu0 0.0
  %408 = vmatprep.subr.mxu0 0.0
  %409 = vmatpush1.msra.mxu0 0.0
  %410 = vmatprep.subr.mxu0 0.0
  %411 = vmatpush1.msra.mxu0 0.0
  %412 = vmatprep.subr.mxu0 0.0
  %413 = vmatpush1.msra.mxu0 0.0
  %414 = vmatprep.subr.mxu0 0.0
  %415 = vmatpush1.msra.mxu0 0.0
  %416 = vmatprep.subr.mxu0 0.0
  %417 = vmatpush1.msra.mxu0 0.0
  %418 = vmatprep.subr.mxu0 0.0
  %419 = vmatpush1.msra.mxu0 0.0
  %420 = vmatprep.subr.mxu0 0.0
  %421 = vmatpush1.msra.mxu0 0.0
  %422 = vmatprep.subr.mxu0 0.0
  %423 = vmatpush1.msra.mxu0 0.0
  %424 = vmatprep.subr.mxu0 0.0
  %425 = vmatpush1.msra.mxu0 0.0
  %426 = vmatprep.subr.mxu0 0.0
  %427 = vmatpush1.msra.mxu0 0.0
  %428 = vmatprep.mubr.f32.mxu0 0.0
  %429 = vmatmul.mubr.f32.gmra.mrb[0].mxu0 %v350
  %v430 = vpop.f32.mrb[0].mxu0
  %v431 = vadd.f32 %v331, %v430
  %v432 = vpop.f32.mrb[0].mxu0
  %433 = vmatprep.mubr.f32.mxu0 0.0
  %434 = vmatmul.mubr.f32.gmra.mrb[0].mxu0 %v353
  %v435 = vpop.f32.mrb[0].mxu0
  %v436 = vadd.f32 %v336, %v435
  %v437 = vpop.f32.mrb[0].mxu0
  %438 = vmatprep.mubr.f32.mxu0 0.0
  %439 = vmatmul.mubr.f32.gmra.mrb[0].mxu0 %v356
  %v440 = vpop.f32.mrb[0].mxu0
  %v441 = vadd.f32 %v341, %v440
  %v442 = vpop.f32.mrb[0].mxu0
  %443 = vmatprep.mubr.f32.mxu0 0.0
  %444 = vmatmul.mubr.f32.gmra.mrb[0].mxu0 %v359
  %v445 = vpop.f32.mrb[0].mxu0
  %v446 = vadd.f32 %v346, %v445
  %v447 = vpop.f32.mrb[0].mxu0
  %448 = vdwg.mxu0
  %v449 = vmax.f32 %v431, 0.0
  %v450 = vmax.f32 %v436, 0.0
  %v451 = vmax.f32 %v441, 0.0
  %v452 = vmax.f32 %v446, 0.0
  %v453 = vadd.f32 %v449, %v450
  %v454 = vadd.f32 %v453, %v451
  %v455 = vadd.f32 %v454, %v452
  %v456 = vrot.slane %v455, 4
  %v457 = vadd.f32 %v455, %v456
  %v458 = vrot.slane %v457, 2
  %v459 = vadd.f32 %v457, %v458
  %v460 = vrot.slane %v459, 1
  %v461 = vadd.f32 %v459, %v460
  %v462 = vrcp.pop 32.0
  %v463 = vmul.f32 %v461, %v462
  %v464 = vsub.f32 %v449, %v463
  %v465 = vsub.f32 %v450, %v463
  %v466 = vsub.f32 %v451, %v463
  %v467 = vsub.f32 %v452, %v463
  %v468 = vmul.f32 %v464, %v464
  %v469 = vmul.f32 %v465, %v465
  %v470 = vmul.f32 %v466, %v466
  %v471 = vmul.f32 %v467, %v467
  %v472 = vadd.f32 %v468, %v469
  %v473 = vadd.f32 %v472, %v470
  %v474 = vadd.f32 %v473, %v471
  %v475 = vrot.slane %v474, 4
  %v476 = vadd.f32 %v474, %v475
  %v477 = vrot.slane %v476, 2
  %v478 = vadd.f32 %v476, %v477
  %v479 = vrot.slane %v478, 1
  %v480 = vadd.f32 %v478, %v479
  %v481 = vmul.f32 %v480, %v462
  %v482 = vadd.f32 %v481, 1e-05
  %v483 = vrsqrt.pop %v482
  %v484 = vmul.f32 %v464, %v483
  %v485 = vmul.f32 %v465, %v483
  %v486 = vmul.f32 %v466, %v483
  %v487 = vmul.f32 %v467, %v483
  %488 = vset.pattern.permute.xlu0 1
  %489 = vperm.xlu0 %488, %v324
  %v490 = vpop.permute.xlu0 %489
  %492 = vset.pattern.permute.xlu0 1
  %493 = vperm.xlu0 %492, %v325
  %v494 = vpop.permute.xlu0 %493
  %496 = vset.pattern.permute.xlu0 1
  %497 = vperm.xlu0 %496, %v326
  %v498 = vpop.permute.xlu0 %497
  %500 = vset.pattern.permute.xlu0 1
  %501 = vperm.xlu0 %500, %v327
  %v502 = vpop.permute.xlu0 %501
  %v504 = vmul.f32 %v484, %v490
  %v505 = vmul.f32 %v485, %v494
  %v506 = vmul.f32 %v486, %v498
  %v507 = vmul.f32 %v487, %v502
  %508 = vset.pattern.permute.xlu0 2
  %509 = vperm.xlu0 %508, %v324
  %v510 = vpop.permute.xlu0 %509
  %512 = vset.pattern.permute.xlu0 2
  %513 = vperm.xlu0 %512, %v325
  %v514 = vpop.permute.xlu0 %513
  %516 = vset.pattern.permute.xlu0 2
  %517 = vperm.xlu0 %516, %v326
  %v518 = vpop.permute.xlu0 %517
  %520 = vset.pattern.permute.xlu0 2
  %521 = vperm.xlu0 %520, %v327
  %v522 = vpop.permute.xlu0 %521
  %v524 = vadd.f32 %v504, %v510
  %v525 = vadd.f32 %v505, %v514
  %v526 = vadd.f32 %v506, %v518
  %v527 = vadd.f32 %v507, %v522
  %528 = vst [vmem:[%s3] sm:$0xff] %v524
  %529 = vst [vmem:[%s3 + $0x8] sm:$0xff] %v525
  %530 = vst [vmem:[%s3 + $0x10] sm:$0xff] %v526
  %531 = vst [vmem:[%s3 + $0x18] sm:$0xff] %v527
  // Predicated region
  $region14: #{ehr_forward.1} parent=0 // pred_check
    _
  $region15: #{ehr_forward.1} parent=0 // pred_check_branch
    %533 = sbr.rel (0) target = $region17
  $region16: #{ehr_forward.1} parent=0 // pred_region
    _
  $region17: #{ehr_forward.1} parent=0 // pred_fallthru
    _
  // Predicated region
  $region18: #{ehr_forward.1} parent=0 // pred_check
    _
  $region19: #{ehr_forward.1} parent=0 // pred_check_branch
    %535 = sbr.rel (0) target = $region21
  $region20: #{ehr_forward.1} parent=0 // pred_region
    _
  $region21: #{ehr_forward.1} parent=0 // pred_fallthru
    _

</llo_original>
